<compile_context>
chip_gen: v6e
topology: v6e:2x2x1
jax: 0.10.0
libtpu: 0.0.40
codegen_flags: <defaults>
</compile_context>

<pallas_src>
import math

import jax
import jax.numpy as jnp
import numpy as np
from jax.experimental import pallas as pl
from jax.experimental.pallas import tpu as pltpu

_LOG_2PI = float(math.log(2.0 * math.pi))


# ----------------------------- small helpers ---------------------------------
def _mxu_dot(a, b):
    """MXU matmul with f32 accumulation; full-f32 contraction unless bf16 operands."""
    if b.dtype == jnp.bfloat16:
        return jnp.dot(a.astype(jnp.bfloat16), b, preferred_element_type=jnp.float32)
    return jnp.dot(a, b, precision=jax.lax.Precision.HIGHEST,
                   preferred_element_type=jnp.float32)


def _pick_tn(N, max_tile=2048):
    """Pick the batch tile: largest 8-aligned divisor of N <= max_tile, preferring
    an even number of grid steps (v7x shards the 'parallel' axis across 2 TCs),
    then >=2 steps, then the largest aligned divisor.  Fallback is tn == N (the
    full-array block is always a legal BlockSpec)."""
    divs = [t for t in range(1, N + 1) if N % t == 0]
    aligned = [t for t in divs if t % 8 == 0 and t <= max_tile]
    if aligned:
        even_multi = [t for t in aligned if (N // t) >= 2 and (N // t) % 2 == 0]
        if even_multi:
            return max(even_multi)
        multi = [t for t in aligned if (N // t) >= 2]
        if multi:
            return max(multi)
        return max(aligned)
    return N


def _gauss_coeffs(mu, sig):
    # log N(x; mu, sig) = a*x^2 + b*x + c
    inv_var = 1.0 / (sig * sig)
    a = -0.5 * inv_var
    b = mu * inv_var
    c = -0.5 * mu * mu * inv_var - jnp.log(sig) - 0.5 * _LOG_2PI
    return a, b, c


# ------------------------------- kernels --------------------------------------
def make_spn_kernel_single(D, C, K):
    """C2 is None path: leaf1 -> p1(cardinality K) -> s1(out_channels=1).

    Per tile: x (tn, D); ab (2D, G*C) packed [A;B] block-diagonal quadratic-form
    coefficients; c (1, G*C) constants with log-softmax sum weights folded in;
    s (G*C, G) 0/1 group-selector.  Output: (tn, G), one coalesced store.
    """
    G = D // K

    def kernel(x_ref, ab_ref, c_ref, s_ref, o_ref):
        x = x_ref[...]                                     # (tn, D)
        xs = jnp.concatenate([x * x, x], axis=-1)          # (tn, 2D)
        # Leaf log-probs summed over each feature group (Product layer), packed
        # on the lane axis as [g0c0..g0c(C-1), g1c0, ...]  -> one fused matmul.
        t = _mxu_dot(xs, ab_ref[...]) + c_ref[...]         # (tn, G*C)
        # Grouped logsumexp: single row max + exp + selector matmul (MXU),
        # result already lane-contiguous.
        m = jnp.max(t, axis=-1, keepdims=True)             # (tn, 1)
        p = jnp.exp(t - m)                                 # (tn, G*C)
        sums = _mxu_dot(p, s_ref[...])                     # (tn, G)
        o_ref[...] = m + jnp.log(sums)

    return kernel


def make_spn_kernel_c2(D, C, K, C2):
    """C2 path (requires D == K so downstream shapes line up, as in the module).

    Per tile: x (tn, D); ab (2D, 2C) packed [A;B] for both leaves side-by-side;
    c (1, 2C); sw (2C, 2*C2) block-diag [sw1*swc, 0; 0, sw2] softmax'ed weights.
    Output: (tn, 1).
    """
    assert D == K, "C2 branch of SPN only shape-checks when D == K (D/K == 1)"

    def kernel(x_ref, ab_ref, c_ref, sw_ref, o_ref):
        x = x_ref[...]                                     # (tn, D)
        xs = jnp.concatenate([x * x, x], axis=-1)          # (tn, 2D)
        # Both leaves' (leaf -> product over all D features) in one fused matmul.
        y = _mxu_dot(xs, ab_ref[...]) + c_ref[...]         # (tn, 2C)
        # Sum layers + root in probability space with a single shared max:
        #   out = 2*m + log( sum_j swc_j * (e1 @ sw1)_j * (e2 @ sw2)_j )
        m = jnp.max(y, axis=-1, keepdims=True)             # (tn, 1)
        e = jnp.exp(y - m)                                 # (tn, 2C)
        p = _mxu_dot(e, sw_ref[...])                       # (tn, 2*C2)
        prod = p[:, :C2] * p[:, C2:]                       # (tn, C2)  swc already folded in
        s = jnp.sum(prod, axis=-1, keepdims=True)          # (tn, 1)
        o_ref[...] = 2.0 * m + jnp.log(s)

    return kernel


# --------------------- grid-invariant precompute (plain JAX) -------------------
def _prepare_single(p, D, C, K, mxu_dtype):
    G = D // K
    a, b, c = _gauss_coeffs(p["mu1"], p["sig1"])              # (D, C) each
    mask = ((jnp.arange(D)[:, None] // K) == jnp.arange(G)[None, :]).astype(a.dtype)
    A = (a[:, None, :] * mask[:, :, None]).reshape(D, G * C)  # block-diagonal
    B = (b[:, None, :] * mask[:, :, None]).reshape(D, G * C)
    AB = jnp.concatenate([A, B], axis=0)                      # (2D, G*C)
    lw = jax.nn.log_softmax(p["w1"], axis=1)[:, :, 0]         # (G, C)
    cpk = (c.reshape(G, K, C).sum(axis=1) + lw).reshape(1, G * C)
    # 0/1 group selector for grouped logsumexp via MXU.
    S = ((jnp.arange(G * C)[:, None] // C) == jnp.arange(G)[None, :]).astype(jnp.float32)
    return AB.astype(mxu_dtype), cpk.astype(jnp.float32), S.astype(mxu_dtype)


def _prepare_c2(p, D, C, C2, mxu_dtype):
    a1, b1, c1 = _gauss_coeffs(p["mu1"], p["sig1"])
    a2, b2, c2 = _gauss_coeffs(p["mu2"], p["sig2"])
    A = jnp.concatenate([a1, a2], axis=1)                     # (D, 2C)
    B = jnp.concatenate([b1, b2], axis=1)
    AB = jnp.concatenate([A, B], axis=0)                      # (2D, 2C)
    cc = jnp.concatenate([c1.sum(0, keepdims=True), c2.sum(0, keepdims=True)], axis=1)
    sw1 = jax.nn.softmax(p["w1"][0], axis=0)                  # (C, C2)
    sw2 = jax.nn.softmax(p["w2"][0], axis=0)
    swc = jax.nn.softmax(p["wc"][0, :, 0])[None, :]           # (1, C2)
    zeros = jnp.zeros((C, C2), sw1.dtype)
    sw_blk = jnp.concatenate(
        [jnp.concatenate([sw1 * swc, zeros], axis=1),         # root weights folded
         jnp.concatenate([zeros, sw2], axis=1)], axis=0)      # (2C, 2*C2)
    return AB.astype(mxu_dtype), cc.astype(jnp.float32), sw_blk.astype(mxu_dtype)


# ------------------------------- wrapper ---------------------------------------
def spn_forward(x, params, *, D, C, K, C2=None, tn=None, use_bf16_mxu=False):
    # NOTE: for very small batches (N < ~1k) a plain-XLA fusion of the same folded
    # coefficients would avoid per-grid-step overhead entirely; kept on the Pallas
    # path here since this script is a kernel demo.
    N = x.shape[0]
    if tn is None:
        tn = _pick_tn(N)
    assert N % tn == 0, "batch must be divisible by the tile size (pad if ragged)"
    grid = (N // tn,)
    # use_bf16_mxu only on v6e/v7x and only if tolerance allows (quadratic coeffs
    # lose precision in bf16); default f32 + HIGHEST keeps full accuracy.
    mxu_dtype = jnp.bfloat16 if use_bf16_mxu else jnp.float32
    cparams = pltpu.CompilerParams(dimension_semantics=("parallel",))

    if C2 is None:
        G = D // K
        AB, cpk, S = _prepare_single(params, D, C, K, mxu_dtype)
        out = pl.pallas_call(
            make_spn_kernel_single(D, C, K),
            out_shape=jax.ShapeDtypeStruct((N, G), jnp.float32),
            grid=grid,
            in_specs=[
                pl.BlockSpec((tn, D), lambda i: (i, 0)),
                pl.BlockSpec((2 * D, G * C), lambda i: (0, 0)),
                pl.BlockSpec((1, G * C), lambda i: (0, 0)),
                pl.BlockSpec((G * C, G), lambda i: (0, 0)),
            ],
            out_specs=pl.BlockSpec((tn, G), lambda i: (i, 0)),
            compiler_params=cparams,
        )(x, AB, cpk, S)
        return out[:, :, None]                                # (N, D//K, 1)

    AB, cc, sw_blk = _prepare_c2(params, D, C, C2, mxu_dtype)
    out = pl.pallas_call(
        make_spn_kernel_c2(D, C, K, C2),
        out_shape=jax.ShapeDtypeStruct((N, 1), jnp.float32),
        grid=grid,
        in_specs=[
            pl.BlockSpec((tn, D), lambda i: (i, 0)),
            pl.BlockSpec((2 * D, 2 * C), lambda i: (0, 0)),
            pl.BlockSpec((1, 2 * C), lambda i: (0, 0)),
            pl.BlockSpec((2 * C, 2 * C2), lambda i: (0, 0)),
        ],
        out_specs=pl.BlockSpec((tn, 1), lambda i: (i, 0)),
        compiler_params=cparams,
    )(x, AB, cc, sw_blk)
    return out[:, :, None]                                    # (N, 1, 1)


# ------------------------ params + pure-JAX reference --------------------------
def init_params(key, D, C, K, C2=None):
    ks = jax.random.split(key, 7)
    G = D // K
    p = {
        "mu1": jax.random.normal(ks[0], (D, C), jnp.float32),
        "sig1": jax.random.uniform(ks[1], (D, C), jnp.float32, 0.5, 1.5),
    }
    if C2 is None:
        p["w1"] = jax.random.normal(ks[2], (G, C, 1), jnp.float32)
    else:
        p["mu2"] = jax.random.normal(ks[2], (D, C), jnp.float32)
        p["sig2"] = jax.random.uniform(ks[3], (D, C), jnp.float32, 0.5, 1.5)
        p["w1"] = jax.random.normal(ks[4], (G, C, C2), jnp.float32)
        p["w2"] = jax.random.normal(ks[5], (G, C, C2), jnp.float32)
        p["wc"] = jax.random.normal(ks[6], (1, C2, 1), jnp.float32)
    return p


def ref_forward(x, p, D, C, K, C2=None):
    def leaf(x, mu, sig):
        xe = x[:, :, None]
        return -0.5 * ((xe - mu) / sig) ** 2 - jnp.log(sig) - 0.5 * _LOG_2PI

    def product(lp, card):
        n, din, cin = lp.shape
        return lp.reshape(n, din // card, card, cin).sum(axis=2)

    def sumlayer(y, w):  # w: (F, IC, OC), softmax over IC
        lw = jax.nn.log_softmax(w, axis=1)
        return jax.scipy.special.logsumexp(y[:, :, :, None] + lw[None], axis=2)

    if C2 is None:
        return sumlayer(product(leaf(x, p["mu1"], p["sig1"]), K), p["w1"])
    x1 = sumlayer(product(leaf(x, p["mu1"], p["sig1"]), K), p["w1"])
    x2 = sumlayer(product(leaf(x, p["mu2"], p["sig2"]), K), p["w2"])
    xc = jnp.concatenate([x1, x2], axis=1)
    xc = product(xc, 2)
    return sumlayer(xc, p["wc"])


# ----------------------------------- main ---------------------------------------
if __name__ == "__main__":
    key = jax.random.PRNGKey(0)
    kx, kp1, kp2 = jax.random.split(key, 3)

    # Case 1: SPN(D=16, C=32, K=4) -> output (N, D//K, 1); G*C = 128 (one vreg width)
    N, D, C, K = 16, 16, 32, 4          # N=16 -> tn=8: 2 (even) grid steps (v7x-friendly)
    x = jax.random.normal(kx, (N, D), jnp.float32)
    p1 = init_params(kp1, D, C, K, C2=None)
    out1 = jax.block_until_ready(spn_forward(x, p1, D=D, C=C, K=K, C2=None))
    ref1 = ref_forward(x, p1, D, C, K, None)
    assert out1.shape == (N, D // K, 1)
    np.testing.assert_allclose(np.asarray(out1), np.asarray(ref1), rtol=1e-4, atol=1e-4)

    # Case 2: SPN(D=16, C=32, K=16, C2=8) -> output (N, 1, 1)
    D2, C_2, K2, C2 = 16, 32, 16, 8
    p2 = init_params(kp2, D2, C_2, K2, C2=C2)
    out2 = jax.block_until_ready(spn_forward(x, p2, D=D2, C=C_2, K=K2, C2=C2))
    ref2 = ref_forward(x, p2, D2, C_2, K2, C2)
    assert out2.shape == (N, 1, 1)
    np.testing.assert_allclose(np.asarray(out2), np.asarray(ref2), rtol=1e-4, atol=1e-4)

    # TODO(synk): SPN.sample() (ancestral sampling path) is not part of forward and is not implemented.
    print("KERNEL_OK")
</pallas_src>

<mosaic_0001>
module attributes {stable_mosaic.version = 11 : i64} {
  func.func @kernel(%arg0: i32, %arg1: memref<8x16xf32, #tpu.memory_space<vmem>>, %arg2: memref<32x128xf32, #tpu.memory_space<vmem>>, %arg3: memref<1x128xf32, #tpu.memory_space<vmem>>, %arg4: memref<128x4xf32, #tpu.memory_space<vmem>>, %arg5: memref<8x4xf32, #tpu.memory_space<vmem>>) attributes {dimension_semantics = [#tpu.dimension_semantics<parallel>], iteration_bounds = array<i64: 2>, scalar_prefetch = 0 : i64, scratch_operands = 0 : i64, tpu.core_type = #tpu.core_type<tc>, window_params = [{transform_indices = @transform_0, window_bounds = array<i64: 8, 16>}, {pipeline_mode = #tpu.pipeline_mode<synchronous>, transform_indices = @transform_1, window_bounds = array<i64: 32, 128>}, {pipeline_mode = #tpu.pipeline_mode<synchronous>, transform_indices = @transform_2, window_bounds = array<i64: 1, 128>}, {pipeline_mode = #tpu.pipeline_mode<synchronous>, transform_indices = @transform_3, window_bounds = array<i64: 128, 4>}, {transform_indices = @transform_4, window_bounds = array<i64: 8, 4>}]} {
    %c0 = arith.constant 0 : index
    %c0_0 = arith.constant 0 : index
    %0 = vector.load %arg1[%c0, %c0_0] : memref<8x16xf32, #tpu.memory_space<vmem>>, vector<8x16xf32>
    %1 = arith.mulf %0, %0 : vector<8x16xf32>
    %2 = tpu.concatenate %1, %0 in 1 : vector<8x16xf32>, vector<8x16xf32> -> vector<8x32xf32>
    %c0_1 = arith.constant 0 : index
    %c0_2 = arith.constant 0 : index
    %3 = vector.load %arg2[%c0_1, %c0_2] : memref<32x128xf32, #tpu.memory_space<vmem>>, vector<32x128xf32>
    %cst = arith.constant dense<0.000000e+00> : vector<8x128xf32>
    %4 = tpu.matmul %2, %3, %cst {dimension_numbers = #tpu.dot_dimension_numbers<[1], [0], [0], [1], [0, 0, 1, 1], [], []>, precision = #tpu.contract_precision<fp32>} : vector<8x32xf32>, vector<32x128xf32>, vector<8x128xf32> -> vector<8x128xf32>
    %c0_3 = arith.constant 0 : index
    %c0_4 = arith.constant 0 : index
    %5 = vector.load %arg3[%c0_3, %c0_4] : memref<1x128xf32, #tpu.memory_space<vmem>>, vector<1x128xf32>
    %6 = vector.broadcast %5 : vector<1x128xf32> to vector<8x128xf32>
    %7 = arith.addf %4, %6 : vector<8x128xf32>
    %cst_5 = arith.constant dense<0xFF800000> : vector<8xf32>
    %8 = vector.multi_reduction <maximumf>, %7, %cst_5 [1] : vector<8x128xf32> to vector<8xf32>
    %9 = vector.shape_cast %8 : vector<8xf32> to vector<8x1xf32>
    %10 = vector.broadcast %9 : vector<8x1xf32> to vector<8x128xf32>
    %11 = arith.subf %7, %10 : vector<8x128xf32>
    %12 = math.exp %11 : vector<8x128xf32>
    %c0_6 = arith.constant 0 : index
    %c0_7 = arith.constant 0 : index
    %13 = vector.load %arg4[%c0_6, %c0_7] : memref<128x4xf32, #tpu.memory_space<vmem>>, vector<128x4xf32>
    %cst_8 = arith.constant dense<0.000000e+00> : vector<8x4xf32>
    %14 = tpu.matmul %12, %13, %cst_8 {dimension_numbers = #tpu.dot_dimension_numbers<[1], [0], [0], [1], [0, 0, 1, 1], [], []>, precision = #tpu.contract_precision<fp32>} : vector<8x128xf32>, vector<128x4xf32>, vector<8x4xf32> -> vector<8x4xf32>
    %15 = math.log %14 : vector<8x4xf32>
    %16 = vector.broadcast %9 : vector<8x1xf32> to vector<8x4xf32>
    %17 = arith.addf %16, %15 : vector<8x4xf32>
    %c0_9 = arith.constant 0 : index
    %c0_10 = arith.constant 0 : index
    %18 = vector.load %arg5[%c0_9, %c0_10] : memref<8x4xf32, #tpu.memory_space<vmem>>, vector<8x4xf32>
    tpu.vector_store %arg5[%c0_9, %c0_10], %17 {strides = array<i32>} : memref<8x4xf32, #tpu.memory_space<vmem>>, vector<8x4xf32>,
    return
  }
  func.func @transform_0(%arg0: i32) -> (i32, i32) {
    %c0_i32 = arith.constant 0 : i32
    %c0_i32_0 = arith.constant 0 : i32
    return %arg0, %c0_i32 : i32, i32
  }
  func.func @transform_1(%arg0: i32) -> (i32, i32) {
    %c0_i32 = arith.constant 0 : i32
    %c0_i32_0 = arith.constant 0 : i32
    %c0_i32_1 = arith.constant 0 : i32
    return %c0_i32, %c0_i32_0 : i32, i32
  }
  func.func @transform_2(%arg0: i32) -> (i32, i32) {
    %c0_i32 = arith.constant 0 : i32
    %c0_i32_0 = arith.constant 0 : i32
    %c0_i32_1 = arith.constant 0 : i32
    return %c0_i32, %c0_i32_0 : i32, i32
  }
  func.func @transform_3(%arg0: i32) -> (i32, i32) {
    %c0_i32 = arith.constant 0 : i32
    %c0_i32_0 = arith.constant 0 : i32
    %c0_i32_1 = arith.constant 0 : i32
    return %c0_i32, %c0_i32_0 : i32, i32
  }
  func.func @transform_4(%arg0: i32) -> (i32, i32) {
    %c0_i32 = arith.constant 0 : i32
    %c0_i32_0 = arith.constant 0 : i32
    return %arg0, %c0_i32 : i32, i32
  }
}

</mosaic_0001>

<llo_original>
// kernel: tpu_custom_call.1
$region0: #{tpu_custom_call.1}
  #allocation0 [shape = 'u32[]', space=smem, size = 0x4, offset = 0x4, fixed_abs, tag = 'smem constant byte address 0x4 - core index']
  #allocation1 [shape = 'u32[144,128]{1,0:T(1,128)}', space=vmem, size = 0x12000, scoped, tag = 'internal scratch']
  %s0 = inlined_call_operand.vmem [shape: f32[16,16], index: 0, kind: input, shape index: {}]
  %s1 = inlined_call_operand.vmem [shape: f32[32,128], index: 1, kind: input, shape index: {}]
  %s2 = inlined_call_operand.vmem [shape: f32[1,128], index: 2, kind: input, shape index: {}]
  %s3 = inlined_call_operand.vmem [shape: f32[128,4], index: 3, kind: input, shape index: {}]
  %s4 = inlined_call_operand.vmem [shape: f32[16,4], index: 4, kind: output, shape index: {}]
  %s5 = sld [smem:[#allocation0]]
  $region49: #{tpu_custom_call.1} parent=0
    _
  %s7 = ssub.s32 1, %s5
  %s8 = scalar_select 0, %s7, %s5
  loop: start=0, step=1, limit=4
  $region2: #{tpu_custom_call.1} parent=0 // loop_pre_header
    _
  $region3: #{tpu_custom_call.1} parent=0 // loop_header
    %s10 = sphi 0, %s14
    %p11 = scmp.ge.s32.totalorder %s10, 4
    %s20 = sphi 0, %s22
    %s23 = sphi 0, %s20
    %s24 = sphi 0, %s23
    %s40 = sphi 0, %s24
    %s44 = sphi 0, %s44
    %s46 = sphi 0, %s44
    %s47 = sphi 0, %s46
    %s61 = sphi 0, %s47
    %s65 = sphi 0, %s65
    %s67 = sphi 0, %s65
    %s68 = sphi 0, %s67
    %s82 = sphi 0, %s68
    %s86 = sphi 0, %s86
    %s88 = sphi 0, %s86
    %s89 = sphi 0, %s88
    %s103 = sphi 0, %s89
    %s109 = sphi 0, %s111
    %s112 = sphi 0, %s109
    %s113 = sphi 0, %s112
    %s129 = sphi 0, %s113
  $region4: #{tpu_custom_call.1} parent=0 // loop_header_branch
    %13 = sbr.rel (%p11) target = $region8
  $region5: #{tpu_custom_call.1} parent=0 // loop_body
    %s15 = ssub.s32 %s10, 1
    %s16 = ssub.s32 %s10, 2
    %s17 = sadd.s32 %s10, 1
    %s18 = ssub.s32 %s10, %s17
    %p19 = scmp.eq.s32.totalorder %s18, 0
    %s21 = sadd.s32 %s20, 1
    %s22 = scalar_select %p19, %s20, %s21
    %p25 = pneg %p19
    %p26 = scmp.eq.s32.totalorder %s10, 1
    %p27 = por %p25, %p26
    %p28 = scmp.ne.s32.totalorder %s20, %s23
    %p29 = scmp.eq.s32.totalorder %s10, 0
    %p30 = por %p28, %p29
    %p31 = scmp.ne.s32.totalorder %s20, %s23
    %p32 = scmp.eq.s32.totalorder %s15, 1
    %p33 = por %p31, %p32
    %p34 = scmp.ne.s32.totalorder %s23, %s24
    %p35 = scmp.eq.s32.totalorder %s15, 0
    %p36 = por %p34, %p35
    %p37 = scmp.ne.s32.totalorder %s23, %s24
    %p38 = scmp.eq.s32.totalorder %s16, 1
    %p39 = por %p37, %p38
    %p41 = scmp.ne.s32.totalorder %s24, %s40
    %p42 = scmp.eq.s32.totalorder %s16, 0
    %p43 = por %p41, %p42
    %s45 = sadd.s32 %s44, 1
    %p48 = scmp.eq.s32.totalorder %s10, 1
    %p49 = scmp.ne.s32.totalorder %s44, %s46
    %p50 = scmp.eq.s32.totalorder %s10, 0
    %p51 = por %p49, %p50
    %p52 = scmp.ne.s32.totalorder %s44, %s46
    %p53 = scmp.eq.s32.totalorder %s15, 1
    %p54 = por %p52, %p53
    %p55 = scmp.ne.s32.totalorder %s46, %s47
    %p56 = scmp.eq.s32.totalorder %s15, 0
    %p57 = por %p55, %p56
    %p58 = scmp.ne.s32.totalorder %s46, %s47
    %p59 = scmp.eq.s32.totalorder %s16, 1
    %p60 = por %p58, %p59
    %p62 = scmp.ne.s32.totalorder %s47, %s61
    %p63 = scmp.eq.s32.totalorder %s16, 0
    %p64 = por %p62, %p63
    %s66 = sadd.s32 %s65, 1
    %p69 = scmp.eq.s32.totalorder %s10, 1
    %p70 = scmp.ne.s32.totalorder %s65, %s67
    %p71 = scmp.eq.s32.totalorder %s10, 0
    %p72 = por %p70, %p71
    %p73 = scmp.ne.s32.totalorder %s65, %s67
    %p74 = scmp.eq.s32.totalorder %s15, 1
    %p75 = por %p73, %p74
    %p76 = scmp.ne.s32.totalorder %s67, %s68
    %p77 = scmp.eq.s32.totalorder %s15, 0
    %p78 = por %p76, %p77
    %p79 = scmp.ne.s32.totalorder %s67, %s68
    %p80 = scmp.eq.s32.totalorder %s16, 1
    %p81 = por %p79, %p80
    %p83 = scmp.ne.s32.totalorder %s68, %s82
    %p84 = scmp.eq.s32.totalorder %s16, 0
    %p85 = por %p83, %p84
    %s87 = sadd.s32 %s86, 1
    %p90 = scmp.eq.s32.totalorder %s10, 1
    %p91 = scmp.ne.s32.totalorder %s86, %s88
    %p92 = scmp.eq.s32.totalorder %s10, 0
    %p93 = por %p91, %p92
    %p94 = scmp.ne.s32.totalorder %s86, %s88
    %p95 = scmp.eq.s32.totalorder %s15, 1
    %p96 = por %p94, %p95
    %p97 = scmp.ne.s32.totalorder %s88, %s89
    %p98 = scmp.eq.s32.totalorder %s15, 0
    %p99 = por %p97, %p98
    %p100 = scmp.ne.s32.totalorder %s88, %s89
    %p101 = scmp.eq.s32.totalorder %s16, 1
    %p102 = por %p100, %p101
    %p104 = scmp.ne.s32.totalorder %s89, %s103
    %p105 = scmp.eq.s32.totalorder %s16, 0
    %p106 = por %p104, %p105
    %s107 = ssub.s32 %s10, %s17
    %p108 = scmp.eq.s32.totalorder %s107, 0
    %s110 = sadd.s32 %s109, 1
    %s111 = scalar_select %p108, %s109, %s110
    %p114 = pneg %p108
    %p115 = scmp.eq.s32.totalorder %s10, 1
    %p116 = por %p114, %p115
    %p117 = scmp.ne.s32.totalorder %s109, %s112
    %p118 = scmp.eq.s32.totalorder %s10, 0
    %p119 = por %p117, %p118
    %p120 = scmp.ne.s32.totalorder %s109, %s112
    %p121 = scmp.eq.s32.totalorder %s15, 1
    %p122 = por %p120, %p121
    %p123 = scmp.ne.s32.totalorder %s112, %s113
    %p124 = scmp.eq.s32.totalorder %s15, 0
    %p125 = por %p123, %p124
    %p126 = scmp.ne.s32.totalorder %s112, %s113
    %p127 = scmp.eq.s32.totalorder %s16, 1
    %p128 = por %p126, %p127
    %p130 = scmp.ne.s32.totalorder %s113, %s129
    %p131 = scmp.eq.s32.totalorder %s16, 0
    %p132 = por %p130, %p131
    %p133 = scmp.le.s32.totalorder 1, %s10
    %p134 = scmp.lt.s32.totalorder %s10, 3
    %p135 = pnand %p133, %p134
    %p136 = pneg %p135
    // Predicated region
    $region9: #{tpu_custom_call.1} parent=5 // pred_check
      _
    $region10: #{tpu_custom_call.1} parent=5 // pred_check_branch
      %138 = sbr.rel (%p135) target = $region12
    $region11: #{tpu_custom_call.1} parent=5 // pred_region
      %s139 = ssub.s32 %s10, 1
      // Predicated region
      $region13: #{tpu_custom_call.1} parent=11 // pred_check
        %p140 = pneg %p57
      $region14: #{tpu_custom_call.1} parent=11 // pred_check_branch
        %142 = sbr.rel (%p140) target = $region16
      $region15: #{tpu_custom_call.1} parent=11 // pred_region
        _
      $region16: #{tpu_custom_call.1} parent=11 // pred_fallthru
        _
      // Predicated region
      $region17: #{tpu_custom_call.1} parent=11 // pred_check
        %p143 = pneg %p78
      $region18: #{tpu_custom_call.1} parent=11 // pred_check_branch
        %145 = sbr.rel (%p143) target = $region20
      $region19: #{tpu_custom_call.1} parent=11 // pred_region
        _
      $region20: #{tpu_custom_call.1} parent=11 // pred_fallthru
        _
      // Predicated region
      $region21: #{tpu_custom_call.1} parent=11 // pred_check
        %p146 = pneg %p99
      $region22: #{tpu_custom_call.1} parent=11 // pred_check_branch
        %148 = sbr.rel (%p146) target = $region24
      $region23: #{tpu_custom_call.1} parent=11 // pred_region
        _
      $region24: #{tpu_custom_call.1} parent=11 // pred_fallthru
        _
    $region12: #{tpu_custom_call.1} parent=5 // pred_fallthru
      _
    %p149 = scmp.lt.s32.totalorder %s10, 2
    // Predicated region
    $region25: #{tpu_custom_call.1} parent=5 // pred_check
      %p150 = pneg %p149
    $region26: #{tpu_custom_call.1} parent=5 // pred_check_branch
      %152 = sbr.rel (%p150) target = $region28
    $region27: #{tpu_custom_call.1} parent=5 // pred_region
      // Predicated region
      $region29: #{tpu_custom_call.1} parent=27 // pred_check
        %p153 = pneg %p30
      $region30: #{tpu_custom_call.1} parent=27 // pred_check_branch
        %155 = sbr.rel (%p153) target = $region32
      $region31: #{tpu_custom_call.1} parent=27 // pred_region
        %p156 = scmp.lt.s32.totalorder %s10, 1
        %s157 = scalar_select %p156, %s10, 1
        %s158 = smul.addr %s157, 8
        %s159 = scalar_lea.vmem %s0, %s158
      $region32: #{tpu_custom_call.1} parent=27 // pred_fallthru
        _
    $region28: #{tpu_custom_call.1} parent=5 // pred_fallthru
      _
    %p160 = scmp.le.s32.totalorder 1, %s10
    %p161 = scmp.lt.s32.totalorder %s10, 3
    %p162 = pnand %p160, %p161
    %p163 = pneg %p162
    // Predicated region
    $region33: #{tpu_custom_call.1} parent=5 // pred_check
      _
    $region34: #{tpu_custom_call.1} parent=5 // pred_check_branch
      %165 = sbr.rel (%p162) target = $region36
    $region35: #{tpu_custom_call.1} parent=5 // pred_region
      %s166 = ssub.s32 %s10, 1
      %p167 = scmp.lt.s32.totalorder %s15, 1
      %s168 = scalar_select %p167, %s15, 1
      %s169 = smul.addr %s168, 8
      %s170 = scalar_lea.vmem %s0, %s169
      %p171 = pneg %p36
      %p172 = pneg %p33
      %p173 = pneg %p57
      %p174 = pneg %p54
      %p175 = pneg %p78
      %p176 = pneg %p75
      %p177 = pneg %p99
      %p178 = pneg %p96
      %p179 = pneg %p125
      %p180 = pneg %p122
      %p181 = scmp.lt.s32.totalorder %s15, 1
      %s182 = scalar_select %p181, %s15, 1
      %s183 = smul.addr %s182, 8
      %s184 = scalar_lea.vmem %s4, %s183
      %p185 = scmp.lt.s32.totalorder %s15, 1
      %s186 = scalar_select %p185, %s15, 1
      %s187 = smul.addr %s186, 8
      %s188 = scalar_lea.vmem %s0, %s187
      %p189 = scmp.lt.s32.totalorder %s15, 1
      %s190 = scalar_select %p189, %s15, 1
      %s191 = smul.addr %s190, 8
      %s192 = scalar_lea.vmem %s4, %s191
      %v193 = vld [vmem:[%s188] sm:$0xff]
      %v194 = vmul.f32 %v193, %v193
      %196 = vrot.lane.b32.xlu0 %v193, 16
      %v197 = vpop.permute.xlu0 %196
      %vm199 = vcmask 130048
      %v200 = vsel %vm199, %v194, %v197
      %v201 = vld [vmem:[%s1] sm:$0xff]
      %v202 = vld [vmem:[%s1 + $0x8] sm:$0xff]
      %v203 = vld [vmem:[%s1 + $0x10] sm:$0xff]
      %v204 = vld [vmem:[%s1 + $0x18] sm:$0xff]
      %v205 = vld [vmem:[%s2] sm:$0x1]
      %v207 = vlaneseq
      %v208 = vshrl.u32 %v207, 7
      %v209 = vsub.s32 0, %v208
      %v210 = vrot.slane %v205, %v209
      %vm212 = vcmask 261120
      %v214 = vsel %vm212, %v200, 0
      %216 = vmatprep.subr.mxu0 0.0
      %217 = vmatpush1.msra.mxu0 0.0
      %218 = vmatprep.subr.mxu0 0.0
      %219 = vmatpush1.msra.mxu0 0.0
      %220 = vmatprep.subr.mxu0 0.0
      %221 = vmatpush1.msra.mxu0 0.0
      %222 = vmatprep.subr.mxu0 0.0
      %223 = vmatpush1.msra.mxu0 0.0
      %224 = vmatprep.subr.mxu0 0.0
      %225 = vmatpush1.msra.mxu0 0.0
      %226 = vmatprep.subr.mxu0 0.0
      %227 = vmatpush1.msra.mxu0 0.0
      %228 = vmatprep.subr.mxu0 0.0
      %229 = vmatpush1.msra.mxu0 0.0
      %230 = vmatprep.subr.mxu0 0.0
      %231 = vmatpush1.msra.mxu0 0.0
      %232 = vmatprep.subr.mxu0 0.0
      %233 = vmatpush1.msra.mxu0 0.0
      %234 = vmatprep.subr.mxu0 0.0
      %235 = vmatpush1.msra.mxu0 0.0
      %236 = vmatprep.subr.mxu0 0.0
      %237 = vmatpush1.msra.mxu0 0.0
      %238 = vmatprep.subr.mxu0 0.0
      %239 = vmatpush1.msra.mxu0 0.0
      %240 = vmatprep.subr.mxu0 0.0
      %v241 = vand.u32 %v204, 4294901760
      %242 = vmatpush1.msra.mxu0 %v241
      %243 = vmatprep.subr.mxu0 0.0
      %v244 = vand.u32 %v203, 4294901760
      %245 = vmatpush1.msra.mxu0 %v244
      %246 = vmatprep.subr.mxu0 0.0
      %v247 = vand.u32 %v202, 4294901760
      %248 = vmatpush1.msra.mxu0 %v247
      %249 = vmatprep.subr.mxu0 0.0
      %v250 = vand.u32 %v201, 4294901760
      %251 = vmatpush1.msra.mxu0 %v250
      %252 = vmatprep.subr.mxu0 0.0
      %253 = vmatpush2.msra.mxu0 0.0
      %254 = vmatprep.subr.mxu0 0.0
      %255 = vmatpush2.msra.mxu0 0.0
      %256 = vmatprep.subr.mxu0 0.0
      %257 = vmatpush2.msra.mxu0 0.0
      %258 = vmatprep.subr.mxu0 0.0
      %259 = vmatpush2.msra.mxu0 0.0
      %260 = vmatprep.subr.mxu0 0.0
      %261 = vmatpush2.msra.mxu0 0.0
      %262 = vmatprep.subr.mxu0 0.0
      %263 = vmatpush2.msra.mxu0 0.0
      %264 = vmatprep.subr.mxu0 0.0
      %265 = vmatpush2.msra.mxu0 0.0
      %266 = vmatprep.subr.mxu0 0.0
      %267 = vmatpush2.msra.mxu0 0.0
      %268 = vmatprep.subr.mxu0 0.0
      %269 = vmatpush2.msra.mxu0 0.0
      %270 = vmatprep.subr.mxu0 0.0
      %271 = vmatpush2.msra.mxu0 0.0
      %272 = vmatprep.subr.mxu0 0.0
      %273 = vmatpush2.msra.mxu0 0.0
      %274 = vmatprep.subr.mxu0 0.0
      %275 = vmatpush2.msra.mxu0 0.0
      %276 = vmatprep.subr.mxu0 0.0
      %277 = vmatpush2.msra.mxu0 0.0
      %278 = vmatprep.subr.mxu0 0.0
      %279 = vmatpush2.msra.mxu0 0.0
      %280 = vmatprep.subr.mxu0 0.0
      %281 = vmatpush2.msra.mxu0 0.0
      %282 = vmatprep.subr.mxu0 0.0
      %283 = vmatpush2.msra.mxu0 0.0
      %284 = vmatprep.mubr.f32.mxu0 0.0
      %v285 = vand.u32 %v214, 4294901760
      %v286 = vsub.f32 %v214, %v285
      %v287 = vand.u32 %v286, 4294901760
      %v288 = vsub.f32 %v286, %v287
      %v289 = vand.u32 %v288, 4294901760
      %290 = vmatmul.mubr.f32.gmra.mxu0 %v289
      %v291 = vpop.f32.mrf.mxu0
      %v292 = vadd.f32 %v210, %v291
      %v293 = vpop.f32.mrf.mxu0
      %294 = vdwg.mxu0
      %295 = vmatprep.subr.mxu0 0.0
      %296 = vmatpush1.msra.mxu0 0.0
      %297 = vmatprep.subr.mxu0 0.0
      %298 = vmatpush1.msra.mxu0 0.0
      %299 = vmatprep.subr.mxu0 0.0
      %300 = vmatpush1.msra.mxu0 0.0
      %301 = vmatprep.subr.mxu0 0.0
      %302 = vmatpush1.msra.mxu0 0.0
      %303 = vmatprep.subr.mxu0 0.0
      %304 = vmatpush1.msra.mxu0 0.0
      %305 = vmatprep.subr.mxu0 0.0
      %306 = vmatpush1.msra.mxu0 0.0
      %307 = vmatprep.subr.mxu0 0.0
      %308 = vmatpush1.msra.mxu0 0.0
      %309 = vmatprep.subr.mxu0 0.0
      %310 = vmatpush1.msra.mxu0 0.0
      %311 = vmatprep.subr.mxu0 0.0
      %312 = vmatpush1.msra.mxu0 0.0
      %313 = vmatprep.subr.mxu0 0.0
      %314 = vmatpush1.msra.mxu0 0.0
      %315 = vmatprep.subr.mxu0 0.0
      %316 = vmatpush1.msra.mxu0 0.0
      %317 = vmatprep.subr.mxu0 0.0
      %318 = vmatpush1.msra.mxu0 0.0
      %319 = vmatprep.subr.mxu0 0.0
      %v320 = vand.u32 %v204, 4294901760
      %v321 = vsub.f32 %v204, %v320
      %v322 = vand.u32 %v321, 4294901760
      %v323 = vsub.f32 %v321, %v322
      %v324 = vand.u32 %v323, 4294901760
      %325 = vmatpush1.msra.mxu0 %v324
      %326 = vmatprep.subr.mxu0 0.0
      %v327 = vand.u32 %v203, 4294901760
      %v328 = vsub.f32 %v203, %v327
      %v329 = vand.u32 %v328, 4294901760
      %v330 = vsub.f32 %v328, %v329
      %v331 = vand.u32 %v330, 4294901760
      %332 = vmatpush1.msra.mxu0 %v331
      %333 = vmatprep.subr.mxu0 0.0
      %v334 = vand.u32 %v202, 4294901760
      %v335 = vsub.f32 %v202, %v334
      %v336 = vand.u32 %v335, 4294901760
      %v337 = vsub.f32 %v335, %v336
      %v338 = vand.u32 %v337, 4294901760
      %339 = vmatpush1.msra.mxu0 %v338
      %340 = vmatprep.subr.mxu0 0.0
      %v341 = vand.u32 %v201, 4294901760
      %v342 = vsub.f32 %v201, %v341
      %v343 = vand.u32 %v342, 4294901760
      %v344 = vsub.f32 %v342, %v343
      %v345 = vand.u32 %v344, 4294901760
      %346 = vmatpush1.msra.mxu0 %v345
      %347 = vmatprep.subr.mxu0 0.0
      %348 = vmatpush2.msra.mxu0 0.0
      %349 = vmatprep.subr.mxu0 0.0
      %350 = vmatpush2.msra.mxu0 0.0
      %351 = vmatprep.subr.mxu0 0.0
      %352 = vmatpush2.msra.mxu0 0.0
      %353 = vmatprep.subr.mxu0 0.0
      %354 = vmatpush2.msra.mxu0 0.0
      %355 = vmatprep.subr.mxu0 0.0
      %356 = vmatpush2.msra.mxu0 0.0
      %357 = vmatprep.subr.mxu0 0.0
      %358 = vmatpush2.msra.mxu0 0.0
      %359 = vmatprep.subr.mxu0 0.0
      %360 = vmatpush2.msra.mxu0 0.0
      %361 = vmatprep.subr.mxu0 0.0
      %362 = vmatpush2.msra.mxu0 0.0
      %363 = vmatprep.subr.mxu0 0.0
      %364 = vmatpush2.msra.mxu0 0.0
      %365 = vmatprep.subr.mxu0 0.0
      %366 = vmatpush2.msra.mxu0 0.0
      %367 = vmatprep.subr.mxu0 0.0
      %368 = vmatpush2.msra.mxu0 0.0
      %369 = vmatprep.subr.mxu0 0.0
      %370 = vmatpush2.msra.mxu0 0.0
      %371 = vmatprep.subr.mxu0 0.0
      %372 = vmatpush2.msra.mxu0 0.0
      %373 = vmatprep.subr.mxu0 0.0
      %374 = vmatpush2.msra.mxu0 0.0
      %375 = vmatprep.subr.mxu0 0.0
      %376 = vmatpush2.msra.mxu0 0.0
      %377 = vmatprep.subr.mxu0 0.0
      %378 = vmatpush2.msra.mxu0 0.0
      %379 = vmatprep.mubr.f32.mxu0 0.0
      %v380 = vand.u32 %v214, 4294901760
      %381 = vmatmul.mubr.f32.gmra.mxu0 %v380
      %v382 = vpop.f32.mrf.mxu0
      %v383 = vadd.f32 %v292, %v382
      %v384 = vpop.f32.mrf.mxu0
      %385 = vdwg.mxu0
      %386 = vmatprep.subr.mxu0 0.0
      %387 = vmatpush1.msra.mxu0 0.0
      %388 = vmatprep.subr.mxu0 0.0
      %389 = vmatpush1.msra.mxu0 0.0
      %390 = vmatprep.subr.mxu0 0.0
      %391 = vmatpush1.msra.mxu0 0.0
      %392 = vmatprep.subr.mxu0 0.0
      %393 = vmatpush1.msra.mxu0 0.0
      %394 = vmatprep.subr.mxu0 0.0
      %395 = vmatpush1.msra.mxu0 0.0
      %396 = vmatprep.subr.mxu0 0.0
      %397 = vmatpush1.msra.mxu0 0.0
      %398 = vmatprep.subr.mxu0 0.0
      %399 = vmatpush1.msra.mxu0 0.0
      %400 = vmatprep.subr.mxu0 0.0
      %401 = vmatpush1.msra.mxu0 0.0
      %402 = vmatprep.subr.mxu0 0.0
      %403 = vmatpush1.msra.mxu0 0.0
      %404 = vmatprep.subr.mxu0 0.0
      %405 = vmatpush1.msra.mxu0 0.0
      %406 = vmatprep.subr.mxu0 0.0
      %407 = vmatpush1.msra.mxu0 0.0
      %408 = vmatprep.subr.mxu0 0.0
      %409 = vmatpush1.msra.mxu0 0.0
      %410 = vmatprep.subr.mxu0 0.0
      %v411 = vand.u32 %v204, 4294901760
      %v412 = vsub.f32 %v204, %v411
      %413 = vmatpush1.msra.mxu0 %v412
      %414 = vmatprep.subr.mxu0 0.0
      %v415 = vand.u32 %v203, 4294901760
      %v416 = vsub.f32 %v203, %v415
      %417 = vmatpush1.msra.mxu0 %v416
      %418 = vmatprep.subr.mxu0 0.0
      %v419 = vand.u32 %v202, 4294901760
      %v420 = vsub.f32 %v202, %v419
      %421 = vmatpush1.msra.mxu0 %v420
      %422 = vmatprep.subr.mxu0 0.0
      %v423 = vand.u32 %v201, 4294901760
      %v424 = vsub.f32 %v201, %v423
      %425 = vmatpush1.msra.mxu0 %v424
      %426 = vmatprep.subr.mxu0 0.0
      %427 = vmatpush2.msra.mxu0 0.0
      %428 = vmatprep.subr.mxu0 0.0
      %429 = vmatpush2.msra.mxu0 0.0
      %430 = vmatprep.subr.mxu0 0.0
      %431 = vmatpush2.msra.mxu0 0.0
      %432 = vmatprep.subr.mxu0 0.0
      %433 = vmatpush2.msra.mxu0 0.0
      %434 = vmatprep.subr.mxu0 0.0
      %435 = vmatpush2.msra.mxu0 0.0
      %436 = vmatprep.subr.mxu0 0.0
      %437 = vmatpush2.msra.mxu0 0.0
      %438 = vmatprep.subr.mxu0 0.0
      %439 = vmatpush2.msra.mxu0 0.0
      %440 = vmatprep.subr.mxu0 0.0
      %441 = vmatpush2.msra.mxu0 0.0
      %442 = vmatprep.subr.mxu0 0.0
      %443 = vmatpush2.msra.mxu0 0.0
      %444 = vmatprep.subr.mxu0 0.0
      %445 = vmatpush2.msra.mxu0 0.0
      %446 = vmatprep.subr.mxu0 0.0
      %447 = vmatpush2.msra.mxu0 0.0
      %448 = vmatprep.subr.mxu0 0.0
      %449 = vmatpush2.msra.mxu0 0.0
      %450 = vmatprep.subr.mxu0 0.0
      %451 = vmatpush2.msra.mxu0 0.0
      %452 = vmatprep.subr.mxu0 0.0
      %453 = vmatpush2.msra.mxu0 0.0
      %454 = vmatprep.subr.mxu0 0.0
      %455 = vmatpush2.msra.mxu0 0.0
      %456 = vmatprep.subr.mxu0 0.0
      %457 = vmatpush2.msra.mxu0 0.0
      %458 = vmatprep.mubr.f32.mxu0 0.0
      %v459 = vand.u32 %v214, 4294901760
      %v460 = vsub.f32 %v214, %v459
      %461 = vmatmul.mubr.f32.gmra.mxu0 %v460
      %v462 = vpop.f32.mrf.mxu0
      %v463 = vadd.f32 %v383, %v462
      %v464 = vpop.f32.mrf.mxu0
      %465 = vdwg.mxu0
      %466 = vmatprep.subr.mxu0 0.0
      %467 = vmatpush1.msra.mxu0 0.0
      %468 = vmatprep.subr.mxu0 0.0
      %469 = vmatpush1.msra.mxu0 0.0
      %470 = vmatprep.subr.mxu0 0.0
      %471 = vmatpush1.msra.mxu0 0.0
      %472 = vmatprep.subr.mxu0 0.0
      %473 = vmatpush1.msra.mxu0 0.0
      %474 = vmatprep.subr.mxu0 0.0
      %475 = vmatpush1.msra.mxu0 0.0
      %476 = vmatprep.subr.mxu0 0.0
      %477 = vmatpush1.msra.mxu0 0.0
      %478 = vmatprep.subr.mxu0 0.0
      %479 = vmatpush1.msra.mxu0 0.0
      %480 = vmatprep.subr.mxu0 0.0
      %481 = vmatpush1.msra.mxu0 0.0
      %482 = vmatprep.subr.mxu0 0.0
      %483 = vmatpush1.msra.mxu0 0.0
      %484 = vmatprep.subr.mxu0 0.0
      %485 = vmatpush1.msra.mxu0 0.0
      %486 = vmatprep.subr.mxu0 0.0
      %487 = vmatpush1.msra.mxu0 0.0
      %488 = vmatprep.subr.mxu0 0.0
      %489 = vmatpush1.msra.mxu0 0.0
      %490 = vmatprep.subr.mxu0 0.0
      %v491 = vand.u32 %v204, 4294901760
      %492 = vmatpush1.msra.mxu0 %v491
      %493 = vmatprep.subr.mxu0 0.0
      %v494 = vand.u32 %v203, 4294901760
      %495 = vmatpush1.msra.mxu0 %v494
      %496 = vmatprep.subr.mxu0 0.0
      %v497 = vand.u32 %v202, 4294901760
      %498 = vmatpush1.msra.mxu0 %v497
      %499 = vmatprep.subr.mxu0 0.0
      %v500 = vand.u32 %v201, 4294901760
      %501 = vmatpush1.msra.mxu0 %v500
      %502 = vmatprep.subr.mxu0 0.0
      %503 = vmatpush2.msra.mxu0 0.0
      %504 = vmatprep.subr.mxu0 0.0
      %505 = vmatpush2.msra.mxu0 0.0
      %506 = vmatprep.subr.mxu0 0.0
      %507 = vmatpush2.msra.mxu0 0.0
      %508 = vmatprep.subr.mxu0 0.0
      %509 = vmatpush2.msra.mxu0 0.0
      %510 = vmatprep.subr.mxu0 0.0
      %511 = vmatpush2.msra.mxu0 0.0
      %512 = vmatprep.subr.mxu0 0.0
      %513 = vmatpush2.msra.mxu0 0.0
      %514 = vmatprep.subr.mxu0 0.0
      %515 = vmatpush2.msra.mxu0 0.0
      %516 = vmatprep.subr.mxu0 0.0
      %517 = vmatpush2.msra.mxu0 0.0
      %518 = vmatprep.subr.mxu0 0.0
      %519 = vmatpush2.msra.mxu0 0.0
      %520 = vmatprep.subr.mxu0 0.0
      %521 = vmatpush2.msra.mxu0 0.0
      %522 = vmatprep.subr.mxu0 0.0
      %523 = vmatpush2.msra.mxu0 0.0
      %524 = vmatprep.subr.mxu0 0.0
      %525 = vmatpush2.msra.mxu0 0.0
      %526 = vmatprep.subr.mxu0 0.0
      %527 = vmatpush2.msra.mxu0 0.0
      %528 = vmatprep.subr.mxu0 0.0
      %529 = vmatpush2.msra.mxu0 0.0
      %530 = vmatprep.subr.mxu0 0.0
      %531 = vmatpush2.msra.mxu0 0.0
      %532 = vmatprep.subr.mxu0 0.0
      %533 = vmatpush2.msra.mxu0 0.0
      %534 = vmatprep.mubr.f32.mxu0 0.0
      %v535 = vand.u32 %v214, 4294901760
      %v536 = vsub.f32 %v214, %v535
      %v537 = vand.u32 %v536, 4294901760
      %538 = vmatmul.mubr.f32.gmra.mxu0 %v537
      %v539 = vpop.f32.mrf.mxu0
      %v540 = vadd.f32 %v463, %v539
      %v541 = vpop.f32.mrf.mxu0
      %542 = vdwg.mxu0
      %543 = vmatprep.subr.mxu0 0.0
      %544 = vmatpush1.msra.mxu0 0.0
      %545 = vmatprep.subr.mxu0 0.0
      %546 = vmatpush1.msra.mxu0 0.0
      %547 = vmatprep.subr.mxu0 0.0
      %548 = vmatpush1.msra.mxu0 0.0
      %549 = vmatprep.subr.mxu0 0.0
      %550 = vmatpush1.msra.mxu0 0.0
      %551 = vmatprep.subr.mxu0 0.0
      %552 = vmatpush1.msra.mxu0 0.0
      %553 = vmatprep.subr.mxu0 0.0
      %554 = vmatpush1.msra.mxu0 0.0
      %555 = vmatprep.subr.mxu0 0.0
      %556 = vmatpush1.msra.mxu0 0.0
      %557 = vmatprep.subr.mxu0 0.0
      %558 = vmatpush1.msra.mxu0 0.0
      %559 = vmatprep.subr.mxu0 0.0
      %560 = vmatpush1.msra.mxu0 0.0
      %561 = vmatprep.subr.mxu0 0.0
      %562 = vmatpush1.msra.mxu0 0.0
      %563 = vmatprep.subr.mxu0 0.0
      %564 = vmatpush1.msra.mxu0 0.0
      %565 = vmatprep.subr.mxu0 0.0
      %566 = vmatpush1.msra.mxu0 0.0
      %567 = vmatprep.subr.mxu0 0.0
      %v568 = vand.u32 %v204, 4294901760
      %v569 = vsub.f32 %v204, %v568
      %v570 = vand.u32 %v569, 4294901760
      %571 = vmatpush1.msra.mxu0 %v570
      %572 = vmatprep.subr.mxu0 0.0
      %v573 = vand.u32 %v203, 4294901760
      %v574 = vsub.f32 %v203, %v573
      %v575 = vand.u32 %v574, 4294901760
      %576 = vmatpush1.msra.mxu0 %v575
      %577 = vmatprep.subr.mxu0 0.0
      %v578 = vand.u32 %v202, 4294901760
      %v579 = vsub.f32 %v202, %v578
      %v580 = vand.u32 %v579, 4294901760
      %581 = vmatpush1.msra.mxu0 %v580
      %582 = vmatprep.subr.mxu0 0.0
      %v583 = vand.u32 %v201, 4294901760
      %v584 = vsub.f32 %v201, %v583
      %v585 = vand.u32 %v584, 4294901760
      %586 = vmatpush1.msra.mxu0 %v585
      %587 = vmatprep.subr.mxu0 0.0
      %588 = vmatpush2.msra.mxu0 0.0
      %589 = vmatprep.subr.mxu0 0.0
      %590 = vmatpush2.msra.mxu0 0.0
      %591 = vmatprep.subr.mxu0 0.0
      %592 = vmatpush2.msra.mxu0 0.0
      %593 = vmatprep.subr.mxu0 0.0
      %594 = vmatpush2.msra.mxu0 0.0
      %595 = vmatprep.subr.mxu0 0.0
      %596 = vmatpush2.msra.mxu0 0.0
      %597 = vmatprep.subr.mxu0 0.0
      %598 = vmatpush2.msra.mxu0 0.0
      %599 = vmatprep.subr.mxu0 0.0
      %600 = vmatpush2.msra.mxu0 0.0
      %601 = vmatprep.subr.mxu0 0.0
      %602 = vmatpush2.msra.mxu0 0.0
      %603 = vmatprep.subr.mxu0 0.0
      %604 = vmatpush2.msra.mxu0 0.0
      %605 = vmatprep.subr.mxu0 0.0
      %606 = vmatpush2.msra.mxu0 0.0
      %607 = vmatprep.subr.mxu0 0.0
      %608 = vmatpush2.msra.mxu0 0.0
      %609 = vmatprep.subr.mxu0 0.0
      %610 = vmatpush2.msra.mxu0 0.0
      %611 = vmatprep.subr.mxu0 0.0
      %612 = vmatpush2.msra.mxu0 0.0
      %613 = vmatprep.subr.mxu0 0.0
      %614 = vmatpush2.msra.mxu0 0.0
      %615 = vmatprep.subr.mxu0 0.0
      %616 = vmatpush2.msra.mxu0 0.0
      %617 = vmatprep.subr.mxu0 0.0
      %618 = vmatpush2.msra.mxu0 0.0
      %619 = vmatprep.mubr.f32.mxu0 0.0
      %v620 = vand.u32 %v214, 4294901760
      %621 = vmatmul.mubr.f32.gmra.mxu0 %v620
      %v622 = vpop.f32.mrf.mxu0
      %v623 = vadd.f32 %v540, %v622
      %v624 = vpop.f32.mrf.mxu0
      %625 = vdwg.mxu0
      %626 = vmatprep.subr.mxu0 0.0
      %627 = vmatpush1.msra.mxu0 0.0
      %628 = vmatprep.subr.mxu0 0.0
      %629 = vmatpush1.msra.mxu0 0.0
      %630 = vmatprep.subr.mxu0 0.0
      %631 = vmatpush1.msra.mxu0 0.0
      %632 = vmatprep.subr.mxu0 0.0
      %633 = vmatpush1.msra.mxu0 0.0
      %634 = vmatprep.subr.mxu0 0.0
      %635 = vmatpush1.msra.mxu0 0.0
      %636 = vmatprep.subr.mxu0 0.0
      %637 = vmatpush1.msra.mxu0 0.0
      %638 = vmatprep.subr.mxu0 0.0
      %639 = vmatpush1.msra.mxu0 0.0
      %640 = vmatprep.subr.mxu0 0.0
      %641 = vmatpush1.msra.mxu0 0.0
      %642 = vmatprep.subr.mxu0 0.0
      %643 = vmatpush1.msra.mxu0 0.0
      %644 = vmatprep.subr.mxu0 0.0
      %645 = vmatpush1.msra.mxu0 0.0
      %646 = vmatprep.subr.mxu0 0.0
      %647 = vmatpush1.msra.mxu0 0.0
      %648 = vmatprep.subr.mxu0 0.0
      %649 = vmatpush1.msra.mxu0 0.0
      %650 = vmatprep.subr.mxu0 0.0
      %v651 = vand.u32 %v204, 4294901760
      %652 = vmatpush1.msra.mxu0 %v651
      %653 = vmatprep.subr.mxu0 0.0
      %v654 = vand.u32 %v203, 4294901760
      %655 = vmatpush1.msra.mxu0 %v654
      %656 = vmatprep.subr.mxu0 0.0
      %v657 = vand.u32 %v202, 4294901760
      %658 = vmatpush1.msra.mxu0 %v657
      %659 = vmatprep.subr.mxu0 0.0
      %v660 = vand.u32 %v201, 4294901760
      %661 = vmatpush1.msra.mxu0 %v660
      %662 = vmatprep.subr.mxu0 0.0
      %663 = vmatpush2.msra.mxu0 0.0
      %664 = vmatprep.subr.mxu0 0.0
      %665 = vmatpush2.msra.mxu0 0.0
      %666 = vmatprep.subr.mxu0 0.0
      %667 = vmatpush2.msra.mxu0 0.0
      %668 = vmatprep.subr.mxu0 0.0
      %669 = vmatpush2.msra.mxu0 0.0
      %670 = vmatprep.subr.mxu0 0.0
      %671 = vmatpush2.msra.mxu0 0.0
      %672 = vmatprep.subr.mxu0 0.0
      %673 = vmatpush2.msra.mxu0 0.0
      %674 = vmatprep.subr.mxu0 0.0
      %675 = vmatpush2.msra.mxu0 0.0
      %676 = vmatprep.subr.mxu0 0.0
      %677 = vmatpush2.msra.mxu0 0.0
      %678 = vmatprep.subr.mxu0 0.0
      %679 = vmatpush2.msra.mxu0 0.0
      %680 = vmatprep.subr.mxu0 0.0
      %681 = vmatpush2.msra.mxu0 0.0
      %682 = vmatprep.subr.mxu0 0.0
      %683 = vmatpush2.msra.mxu0 0.0
      %684 = vmatprep.subr.mxu0 0.0
      %685 = vmatpush2.msra.mxu0 0.0
      %686 = vmatprep.subr.mxu0 0.0
      %687 = vmatpush2.msra.mxu0 0.0
      %688 = vmatprep.subr.mxu0 0.0
      %689 = vmatpush2.msra.mxu0 0.0
      %690 = vmatprep.subr.mxu0 0.0
      %691 = vmatpush2.msra.mxu0 0.0
      %692 = vmatprep.subr.mxu0 0.0
      %693 = vmatpush2.msra.mxu0 0.0
      %694 = vmatprep.mubr.f32.mxu0 0.0
      %v695 = vand.u32 %v214, 4294901760
      %696 = vmatmul.mubr.f32.gmra.mxu0 %v695
      %v697 = vpop.f32.mrf.mxu0
      %v698 = vadd.f32 %v623, %v697
      %v699 = vpop.f32.mrf.mxu0
      %700 = vdwg.mxu0
      %701 = vmax.xlane.f32.xlu0 %v698
      %v702 = vpop.xlane.xlu0 %701
      %v703 = vsub.f32 %v698, %v702
      %v704 = vmul.f32 %v703, 1.442695
      %v705 = vpow.pop %v704
      %v706 = vld [vmem:[%s3] sm:$0xff]
      %v707 = vld [vmem:[%s3 + $0x8] sm:$0xff]
      %v708 = vld [vmem:[%s3 + $0x10] sm:$0xff]
      %v709 = vld [vmem:[%s3 + $0x18] sm:$0xff]
      %v710 = vld [vmem:[%s3 + $0x20] sm:$0xff]
      %v711 = vld [vmem:[%s3 + $0x28] sm:$0xff]
      %v712 = vld [vmem:[%s3 + $0x30] sm:$0xff]
      %v713 = vld [vmem:[%s3 + $0x38] sm:$0xff]
      %v714 = vld [vmem:[%s3 + $0x40] sm:$0xff]
      %v715 = vld [vmem:[%s3 + $0x48] sm:$0xff]
      %v716 = vld [vmem:[%s3 + $0x50] sm:$0xff]
      %v717 = vld [vmem:[%s3 + $0x58] sm:$0xff]
      %v718 = vld [vmem:[%s3 + $0x60] sm:$0xff]
      %v719 = vld [vmem:[%s3 + $0x68] sm:$0xff]
      %v720 = vld [vmem:[%s3 + $0x70] sm:$0xff]
      %v721 = vld [vmem:[%s3 + $0x78] sm:$0xff]
      %722 = vmatprep.subr.mxu0 0.0
      %v723 = vand.u32 %v721, 4294901760
      %724 = vmatpush1.msra.mxu0 %v723
      %725 = vmatprep.subr.mxu0 0.0
      %v726 = vand.u32 %v720, 4294901760
      %727 = vmatpush1.msra.mxu0 %v726
      %728 = vmatprep.subr.mxu0 0.0
      %v729 = vand.u32 %v719, 4294901760
      %730 = vmatpush1.msra.mxu0 %v729
      %731 = vmatprep.subr.mxu0 0.0
      %v732 = vand.u32 %v718, 4294901760
      %733 = vmatpush1.msra.mxu0 %v732
      %734 = vmatprep.subr.mxu0 0.0
      %v735 = vand.u32 %v717, 4294901760
      %736 = vmatpush1.msra.mxu0 %v735
      %737 = vmatprep.subr.mxu0 0.0
      %v738 = vand.u32 %v716, 4294901760
      %739 = vmatpush1.msra.mxu0 %v738
      %740 = vmatprep.subr.mxu0 0.0
      %v741 = vand.u32 %v715, 4294901760
      %742 = vmatpush1.msra.mxu0 %v741
      %743 = vmatprep.subr.mxu0 0.0
      %v744 = vand.u32 %v714, 4294901760
      %745 = vmatpush1.msra.mxu0 %v744
      %746 = vmatprep.subr.mxu0 0.0
      %v747 = vand.u32 %v713, 4294901760
      %748 = vmatpush1.msra.mxu0 %v747
      %749 = vmatprep.subr.mxu0 0.0
      %v750 = vand.u32 %v712, 4294901760
      %751 = vmatpush1.msra.mxu0 %v750
      %752 = vmatprep.subr.mxu0 0.0
      %v753 = vand.u32 %v711, 4294901760
      %754 = vmatpush1.msra.mxu0 %v753
      %755 = vmatprep.subr.mxu0 0.0
      %v756 = vand.u32 %v710, 4294901760
      %757 = vmatpush1.msra.mxu0 %v756
      %758 = vmatprep.subr.mxu0 0.0
      %v759 = vand.u32 %v709, 4294901760
      %760 = vmatpush1.msra.mxu0 %v759
      %761 = vmatprep.subr.mxu0 0.0
      %v762 = vand.u32 %v708, 4294901760
      %763 = vmatpush1.msra.mxu0 %v762
      %764 = vmatprep.subr.mxu0 0.0
      %v765 = vand.u32 %v707, 4294901760
      %766 = vmatpush1.msra.mxu0 %v765
      %767 = vmatprep.subr.mxu0 0.0
      %v768 = vand.u32 %v706, 4294901760
      %769 = vmatpush1.msra.mxu0 %v768
      %770 = vmatprep.subr.mxu0 0.0
      %771 = vmatpush2.msra.mxu0 0.0
      %772 = vmatprep.subr.mxu0 0.0
      %773 = vmatpush2.msra.mxu0 0.0
      %774 = vmatprep.subr.mxu0 0.0
      %775 = vmatpush2.msra.mxu0 0.0
      %776 = vmatprep.subr.mxu0 0.0
      %777 = vmatpush2.msra.mxu0 0.0
      %778 = vmatprep.subr.mxu0 0.0
      %779 = vmatpush2.msra.mxu0 0.0
      %780 = vmatprep.subr.mxu0 0.0
      %781 = vmatpush2.msra.mxu0 0.0
      %782 = vmatprep.subr.mxu0 0.0
      %783 = vmatpush2.msra.mxu0 0.0
      %784 = vmatprep.subr.mxu0 0.0
      %785 = vmatpush2.msra.mxu0 0.0
      %786 = vmatprep.subr.mxu0 0.0
      %787 = vmatpush2.msra.mxu0 0.0
      %788 = vmatprep.subr.mxu0 0.0
      %789 = vmatpush2.msra.mxu0 0.0
      %790 = vmatprep.subr.mxu0 0.0
      %791 = vmatpush2.msra.mxu0 0.0
      %792 = vmatprep.subr.mxu0 0.0
      %793 = vmatpush2.msra.mxu0 0.0
      %794 = vmatprep.subr.mxu0 0.0
      %795 = vmatpush2.msra.mxu0 0.0
      %796 = vmatprep.subr.mxu0 0.0
      %797 = vmatpush2.msra.mxu0 0.0
      %798 = vmatprep.subr.mxu0 0.0
      %799 = vmatpush2.msra.mxu0 0.0
      %800 = vmatprep.subr.mxu0 0.0
      %801 = vmatpush2.msra.mxu0 0.0
      %802 = vmatprep.mubr.f32.mxu0 0.0
      %v803 = vand.u32 %v705, 4294901760
      %v804 = vsub.f32 %v705, %v803
      %v805 = vand.u32 %v804, 4294901760
      %v806 = vsub.f32 %v804, %v805
      %v807 = vand.u32 %v806, 4294901760
      %808 = vmatmul.mubr.f32.gmra.mxu0 %v807
      %v809 = vpop.f32.mrf.mxu0
      %v810 = vadd.f32 0.0, %v809
      %v811 = vpop.f32.mrf.mxu0
      %812 = vdwg.mxu0
      %813 = vmatprep.subr.mxu0 0.0
      %v814 = vand.u32 %v721, 4294901760
      %v815 = vsub.f32 %v721, %v814
      %v816 = vand.u32 %v815, 4294901760
      %v817 = vsub.f32 %v815, %v816
      %v818 = vand.u32 %v817, 4294901760
      %819 = vmatpush1.msra.mxu0 %v818
      %820 = vmatprep.subr.mxu0 0.0
      %v821 = vand.u32 %v720, 4294901760
      %v822 = vsub.f32 %v720, %v821
      %v823 = vand.u32 %v822, 4294901760
      %v824 = vsub.f32 %v822, %v823
      %v825 = vand.u32 %v824, 4294901760
      %826 = vmatpush1.msra.mxu0 %v825
      %827 = vmatprep.subr.mxu0 0.0
      %v828 = vand.u32 %v719, 4294901760
      %v829 = vsub.f32 %v719, %v828
      %v830 = vand.u32 %v829, 4294901760
      %v831 = vsub.f32 %v829, %v830
      %v832 = vand.u32 %v831, 4294901760
      %833 = vmatpush1.msra.mxu0 %v832
      %834 = vmatprep.subr.mxu0 0.0
      %v835 = vand.u32 %v718, 4294901760
      %v836 = vsub.f32 %v718, %v835
      %v837 = vand.u32 %v836, 4294901760
      %v838 = vsub.f32 %v836, %v837
      %v839 = vand.u32 %v838, 4294901760
      %840 = vmatpush1.msra.mxu0 %v839
      %841 = vmatprep.subr.mxu0 0.0
      %v842 = vand.u32 %v717, 4294901760
      %v843 = vsub.f32 %v717, %v842
      %v844 = vand.u32 %v843, 4294901760
      %v845 = vsub.f32 %v843, %v844
      %v846 = vand.u32 %v845, 4294901760
      %847 = vmatpush1.msra.mxu0 %v846
      %848 = vmatprep.subr.mxu0 0.0
      %v849 = vand.u32 %v716, 4294901760
      %v850 = vsub.f32 %v716, %v849
      %v851 = vand.u32 %v850, 4294901760
      %v852 = vsub.f32 %v850, %v851
      %v853 = vand.u32 %v852, 4294901760
      %854 = vmatpush1.msra.mxu0 %v853
      %855 = vmatprep.subr.mxu0 0.0
      %v856 = vand.u32 %v715, 4294901760
      %v857 = vsub.f32 %v715, %v856
      %v858 = vand.u32 %v857, 4294901760
      %v859 = vsub.f32 %v857, %v858
      %v860 = vand.u32 %v859, 4294901760
      %861 = vmatpush1.msra.mxu0 %v860
      %862 = vmatprep.subr.mxu0 0.0
      %v863 = vand.u32 %v714, 4294901760
      %v864 = vsub.f32 %v714, %v863
      %v865 = vand.u32 %v864, 4294901760
      %v866 = vsub.f32 %v864, %v865
      %v867 = vand.u32 %v866, 4294901760
      %868 = vmatpush1.msra.mxu0 %v867
      %869 = vmatprep.subr.mxu0 0.0
      %v870 = vand.u32 %v713, 4294901760
      %v871 = vsub.f32 %v713, %v870
      %v872 = vand.u32 %v871, 4294901760
      %v873 = vsub.f32 %v871, %v872
      %v874 = vand.u32 %v873, 4294901760
      %875 = vmatpush1.msra.mxu0 %v874
      %876 = vmatprep.subr.mxu0 0.0
      %v877 = vand.u32 %v712, 4294901760
      %v878 = vsub.f32 %v712, %v877
      %v879 = vand.u32 %v878, 4294901760
      %v880 = vsub.f32 %v878, %v879
      %v881 = vand.u32 %v880, 4294901760
      %882 = vmatpush1.msra.mxu0 %v881
      %883 = vmatprep.subr.mxu0 0.0
      %v884 = vand.u32 %v711, 4294901760
      %v885 = vsub.f32 %v711, %v884
      %v886 = vand.u32 %v885, 4294901760
      %v887 = vsub.f32 %v885, %v886
      %v888 = vand.u32 %v887, 4294901760
      %889 = vmatpush1.msra.mxu0 %v888
      %890 = vmatprep.subr.mxu0 0.0
      %v891 = vand.u32 %v710, 4294901760
      %v892 = vsub.f32 %v710, %v891
      %v893 = vand.u32 %v892, 4294901760
      %v894 = vsub.f32 %v892, %v893
      %v895 = vand.u32 %v894, 4294901760
      %896 = vmatpush1.msra.mxu0 %v895
      %897 = vmatprep.subr.mxu0 0.0
      %v898 = vand.u32 %v709, 4294901760
      %v899 = vsub.f32 %v709, %v898
      %v900 = vand.u32 %v899, 4294901760
      %v901 = vsub.f32 %v899, %v900
      %v902 = vand.u32 %v901, 4294901760
      %903 = vmatpush1.msra.mxu0 %v902
      %904 = vmatprep.subr.mxu0 0.0
      %v905 = vand.u32 %v708, 4294901760
      %v906 = vsub.f32 %v708, %v905
      %v907 = vand.u32 %v906, 4294901760
      %v908 = vsub.f32 %v906, %v907
      %v909 = vand.u32 %v908, 4294901760
      %910 = vmatpush1.msra.mxu0 %v909
      %911 = vmatprep.subr.mxu0 0.0
      %v912 = vand.u32 %v707, 4294901760
      %v913 = vsub.f32 %v707, %v912
      %v914 = vand.u32 %v913, 4294901760
      %v915 = vsub.f32 %v913, %v914
      %v916 = vand.u32 %v915, 4294901760
      %917 = vmatpush1.msra.mxu0 %v916
      %918 = vmatprep.subr.mxu0 0.0
      %v919 = vand.u32 %v706, 4294901760
      %v920 = vsub.f32 %v706, %v919
      %v921 = vand.u32 %v920, 4294901760
      %v922 = vsub.f32 %v920, %v921
      %v923 = vand.u32 %v922, 4294901760
      %924 = vmatpush1.msra.mxu0 %v923
      %925 = vmatprep.subr.mxu0 0.0
      %926 = vmatpush2.msra.mxu0 0.0
      %927 = vmatprep.subr.mxu0 0.0
      %928 = vmatpush2.msra.mxu0 0.0
      %929 = vmatprep.subr.mxu0 0.0
      %930 = vmatpush2.msra.mxu0 0.0
      %931 = vmatprep.subr.mxu0 0.0
      %932 = vmatpush2.msra.mxu0 0.0
      %933 = vmatprep.subr.mxu0 0.0
      %934 = vmatpush2.msra.mxu0 0.0
      %935 = vmatprep.subr.mxu0 0.0
      %936 = vmatpush2.msra.mxu0 0.0
      %937 = vmatprep.subr.mxu0 0.0
      %938 = vmatpush2.msra.mxu0 0.0
      %939 = vmatprep.subr.mxu0 0.0
      %940 = vmatpush2.msra.mxu0 0.0
      %941 = vmatprep.subr.mxu0 0.0
      %942 = vmatpush2.msra.mxu0 0.0
      %943 = vmatprep.subr.mxu0 0.0
      %944 = vmatpush2.msra.mxu0 0.0
      %945 = vmatprep.subr.mxu0 0.0
      %946 = vmatpush2.msra.mxu0 0.0
      %947 = vmatprep.subr.mxu0 0.0
      %948 = vmatpush2.msra.mxu0 0.0
      %949 = vmatprep.subr.mxu0 0.0
      %950 = vmatpush2.msra.mxu0 0.0
      %951 = vmatprep.subr.mxu0 0.0
      %952 = vmatpush2.msra.mxu0 0.0
      %953 = vmatprep.subr.mxu0 0.0
      %954 = vmatpush2.msra.mxu0 0.0
      %955 = vmatprep.subr.mxu0 0.0
      %956 = vmatpush2.msra.mxu0 0.0
      %957 = vmatprep.mubr.f32.mxu0 0.0
      %v958 = vand.u32 %v705, 4294901760
      %959 = vmatmul.mubr.f32.gmra.mxu0 %v958
      %v960 = vpop.f32.mrf.mxu0
      %v961 = vadd.f32 %v810, %v960
      %v962 = vpop.f32.mrf.mxu0
      %963 = vdwg.mxu0
      %964 = vmatprep.subr.mxu0 0.0
      %v965 = vand.u32 %v721, 4294901760
      %v966 = vsub.f32 %v721, %v965
      %967 = vmatpush1.msra.mxu0 %v966
      %968 = vmatprep.subr.mxu0 0.0
      %v969 = vand.u32 %v720, 4294901760
      %v970 = vsub.f32 %v720, %v969
      %971 = vmatpush1.msra.mxu0 %v970
      %972 = vmatprep.subr.mxu0 0.0
      %v973 = vand.u32 %v719, 4294901760
      %v974 = vsub.f32 %v719, %v973
      %975 = vmatpush1.msra.mxu0 %v974
      %976 = vmatprep.subr.mxu0 0.0
      %v977 = vand.u32 %v718, 4294901760
      %v978 = vsub.f32 %v718, %v977
      %979 = vmatpush1.msra.mxu0 %v978
      %980 = vmatprep.subr.mxu0 0.0
      %v981 = vand.u32 %v717, 4294901760
      %v982 = vsub.f32 %v717, %v981
      %983 = vmatpush1.msra.mxu0 %v982
      %984 = vmatprep.subr.mxu0 0.0
      %v985 = vand.u32 %v716, 4294901760
      %v986 = vsub.f32 %v716, %v985
      %987 = vmatpush1.msra.mxu0 %v986
      %988 = vmatprep.subr.mxu0 0.0
      %v989 = vand.u32 %v715, 4294901760
      %v990 = vsub.f32 %v715, %v989
      %991 = vmatpush1.msra.mxu0 %v990
      %992 = vmatprep.subr.mxu0 0.0
      %v993 = vand.u32 %v714, 4294901760
      %v994 = vsub.f32 %v714, %v993
      %995 = vmatpush1.msra.mxu0 %v994
      %996 = vmatprep.subr.mxu0 0.0
      %v997 = vand.u32 %v713, 4294901760
      %v998 = vsub.f32 %v713, %v997
      %999 = vmatpush1.msra.mxu0 %v998
      %1000 = vmatprep.subr.mxu0 0.0
      %v1001 = vand.u32 %v712, 4294901760
      %v1002 = vsub.f32 %v712, %v1001
      %1003 = vmatpush1.msra.mxu0 %v1002
      %1004 = vmatprep.subr.mxu0 0.0
      %v1005 = vand.u32 %v711, 4294901760
      %v1006 = vsub.f32 %v711, %v1005
      %1007 = vmatpush1.msra.mxu0 %v1006
      %1008 = vmatprep.subr.mxu0 0.0
      %v1009 = vand.u32 %v710, 4294901760
      %v1010 = vsub.f32 %v710, %v1009
      %1011 = vmatpush1.msra.mxu0 %v1010
      %1012 = vmatprep.subr.mxu0 0.0
      %v1013 = vand.u32 %v709, 4294901760
      %v1014 = vsub.f32 %v709, %v1013
      %1015 = vmatpush1.msra.mxu0 %v1014
      %1016 = vmatprep.subr.mxu0 0.0
      %v1017 = vand.u32 %v708, 4294901760
      %v1018 = vsub.f32 %v708, %v1017
      %1019 = vmatpush1.msra.mxu0 %v1018
      %1020 = vmatprep.subr.mxu0 0.0
      %v1021 = vand.u32 %v707, 4294901760
      %v1022 = vsub.f32 %v707, %v1021
      %1023 = vmatpush1.msra.mxu0 %v1022
      %1024 = vmatprep.subr.mxu0 0.0
      %v1025 = vand.u32 %v706, 4294901760
      %v1026 = vsub.f32 %v706, %v1025
      %1027 = vmatpush1.msra.mxu0 %v1026
      %1028 = vmatprep.subr.mxu0 0.0
      %1029 = vmatpush2.msra.mxu0 0.0
      %1030 = vmatprep.subr.mxu0 0.0
      %1031 = vmatpush2.msra.mxu0 0.0
      %1032 = vmatprep.subr.mxu0 0.0
      %1033 = vmatpush2.msra.mxu0 0.0
      %1034 = vmatprep.subr.mxu0 0.0
      %1035 = vmatpush2.msra.mxu0 0.0
      %1036 = vmatprep.subr.mxu0 0.0
      %1037 = vmatpush2.msra.mxu0 0.0
      %1038 = vmatprep.subr.mxu0 0.0
      %1039 = vmatpush2.msra.mxu0 0.0
      %1040 = vmatprep.subr.mxu0 0.0
      %1041 = vmatpush2.msra.mxu0 0.0
      %1042 = vmatprep.subr.mxu0 0.0
      %1043 = vmatpush2.msra.mxu0 0.0
      %1044 = vmatprep.subr.mxu0 0.0
      %1045 = vmatpush2.msra.mxu0 0.0
      %1046 = vmatprep.subr.mxu0 0.0
      %1047 = vmatpush2.msra.mxu0 0.0
      %1048 = vmatprep.subr.mxu0 0.0
      %1049 = vmatpush2.msra.mxu0 0.0
      %1050 = vmatprep.subr.mxu0 0.0
      %1051 = vmatpush2.msra.mxu0 0.0
      %1052 = vmatprep.subr.mxu0 0.0
      %1053 = vmatpush2.msra.mxu0 0.0
      %1054 = vmatprep.subr.mxu0 0.0
      %1055 = vmatpush2.msra.mxu0 0.0
      %1056 = vmatprep.subr.mxu0 0.0
      %1057 = vmatpush2.msra.mxu0 0.0
      %1058 = vmatprep.subr.mxu0 0.0
      %1059 = vmatpush2.msra.mxu0 0.0
      %1060 = vmatprep.mubr.f32.mxu0 0.0
      %v1061 = vand.u32 %v705, 4294901760
      %v1062 = vsub.f32 %v705, %v1061
      %1063 = vmatmul.mubr.f32.gmra.mxu0 %v1062
      %v1064 = vpop.f32.mrf.mxu0
      %v1065 = vadd.f32 %v961, %v1064
      %v1066 = vpop.f32.mrf.mxu0
      %1067 = vdwg.mxu0
      %1068 = vmatprep.subr.mxu0 0.0
      %v1069 = vand.u32 %v721, 4294901760
      %1070 = vmatpush1.msra.mxu0 %v1069
      %1071 = vmatprep.subr.mxu0 0.0
      %v1072 = vand.u32 %v720, 4294901760
      %1073 = vmatpush1.msra.mxu0 %v1072
      %1074 = vmatprep.subr.mxu0 0.0
      %v1075 = vand.u32 %v719, 4294901760
      %1076 = vmatpush1.msra.mxu0 %v1075
      %1077 = vmatprep.subr.mxu0 0.0
      %v1078 = vand.u32 %v718, 4294901760
      %1079 = vmatpush1.msra.mxu0 %v1078
      %1080 = vmatprep.subr.mxu0 0.0
      %v1081 = vand.u32 %v717, 4294901760
      %1082 = vmatpush1.msra.mxu0 %v1081
      %1083 = vmatprep.subr.mxu0 0.0
      %v1084 = vand.u32 %v716, 4294901760
      %1085 = vmatpush1.msra.mxu0 %v1084
      %1086 = vmatprep.subr.mxu0 0.0
      %v1087 = vand.u32 %v715, 4294901760
      %1088 = vmatpush1.msra.mxu0 %v1087
      %1089 = vmatprep.subr.mxu0 0.0
      %v1090 = vand.u32 %v714, 4294901760
      %1091 = vmatpush1.msra.mxu0 %v1090
      %1092 = vmatprep.subr.mxu0 0.0
      %v1093 = vand.u32 %v713, 4294901760
      %1094 = vmatpush1.msra.mxu0 %v1093
      %1095 = vmatprep.subr.mxu0 0.0
      %v1096 = vand.u32 %v712, 4294901760
      %1097 = vmatpush1.msra.mxu0 %v1096
      %1098 = vmatprep.subr.mxu0 0.0
      %v1099 = vand.u32 %v711, 4294901760
      %1100 = vmatpush1.msra.mxu0 %v1099
      %1101 = vmatprep.subr.mxu0 0.0
      %v1102 = vand.u32 %v710, 4294901760
      %1103 = vmatpush1.msra.mxu0 %v1102
      %1104 = vmatprep.subr.mxu0 0.0
      %v1105 = vand.u32 %v709, 4294901760
      %1106 = vmatpush1.msra.mxu0 %v1105
      %1107 = vmatprep.subr.mxu0 0.0
      %v1108 = vand.u32 %v708, 4294901760
      %1109 = vmatpush1.msra.mxu0 %v1108
      %1110 = vmatprep.subr.mxu0 0.0
      %v1111 = vand.u32 %v707, 4294901760
      %1112 = vmatpush1.msra.mxu0 %v1111
      %1113 = vmatprep.subr.mxu0 0.0
      %v1114 = vand.u32 %v706, 4294901760
      %1115 = vmatpush1.msra.mxu0 %v1114
      %1116 = vmatprep.subr.mxu0 0.0
      %1117 = vmatpush2.msra.mxu0 0.0
      %1118 = vmatprep.subr.mxu0 0.0
      %1119 = vmatpush2.msra.mxu0 0.0
      %1120 = vmatprep.subr.mxu0 0.0
      %1121 = vmatpush2.msra.mxu0 0.0
      %1122 = vmatprep.subr.mxu0 0.0
      %1123 = vmatpush2.msra.mxu0 0.0
      %1124 = vmatprep.subr.mxu0 0.0
      %1125 = vmatpush2.msra.mxu0 0.0
      %1126 = vmatprep.subr.mxu0 0.0
      %1127 = vmatpush2.msra.mxu0 0.0
      %1128 = vmatprep.subr.mxu0 0.0
      %1129 = vmatpush2.msra.mxu0 0.0
      %1130 = vmatprep.subr.mxu0 0.0
      %1131 = vmatpush2.msra.mxu0 0.0
      %1132 = vmatprep.subr.mxu0 0.0
      %1133 = vmatpush2.msra.mxu0 0.0
      %1134 = vmatprep.subr.mxu0 0.0
      %1135 = vmatpush2.msra.mxu0 0.0
      %1136 = vmatprep.subr.mxu0 0.0
      %1137 = vmatpush2.msra.mxu0 0.0
      %1138 = vmatprep.subr.mxu0 0.0
      %1139 = vmatpush2.msra.mxu0 0.0
      %1140 = vmatprep.subr.mxu0 0.0
      %1141 = vmatpush2.msra.mxu0 0.0
      %1142 = vmatprep.subr.mxu0 0.0
      %1143 = vmatpush2.msra.mxu0 0.0
      %1144 = vmatprep.subr.mxu0 0.0
      %1145 = vmatpush2.msra.mxu0 0.0
      %1146 = vmatprep.subr.mxu0 0.0
      %1147 = vmatpush2.msra.mxu0 0.0
      %1148 = vmatprep.mubr.f32.mxu0 0.0
      %v1149 = vand.u32 %v705, 4294901760
      %v1150 = vsub.f32 %v705, %v1149
      %v1151 = vand.u32 %v1150, 4294901760
      %1152 = vmatmul.mubr.f32.gmra.mxu0 %v1151
      %v1153 = vpop.f32.mrf.mxu0
      %v1154 = vadd.f32 %v1065, %v1153
      %v1155 = vpop.f32.mrf.mxu0
      %1156 = vdwg.mxu0
      %1157 = vmatprep.subr.mxu0 0.0
      %v1158 = vand.u32 %v721, 4294901760
      %v1159 = vsub.f32 %v721, %v1158
      %v1160 = vand.u32 %v1159, 4294901760
      %1161 = vmatpush1.msra.mxu0 %v1160
      %1162 = vmatprep.subr.mxu0 0.0
      %v1163 = vand.u32 %v720, 4294901760
      %v1164 = vsub.f32 %v720, %v1163
      %v1165 = vand.u32 %v1164, 4294901760
      %1166 = vmatpush1.msra.mxu0 %v1165
      %1167 = vmatprep.subr.mxu0 0.0
      %v1168 = vand.u32 %v719, 4294901760
      %v1169 = vsub.f32 %v719, %v1168
      %v1170 = vand.u32 %v1169, 4294901760
      %1171 = vmatpush1.msra.mxu0 %v1170
      %1172 = vmatprep.subr.mxu0 0.0
      %v1173 = vand.u32 %v718, 4294901760
      %v1174 = vsub.f32 %v718, %v1173
      %v1175 = vand.u32 %v1174, 4294901760
      %1176 = vmatpush1.msra.mxu0 %v1175
      %1177 = vmatprep.subr.mxu0 0.0
      %v1178 = vand.u32 %v717, 4294901760
      %v1179 = vsub.f32 %v717, %v1178
      %v1180 = vand.u32 %v1179, 4294901760
      %1181 = vmatpush1.msra.mxu0 %v1180
      %1182 = vmatprep.subr.mxu0 0.0
      %v1183 = vand.u32 %v716, 4294901760
      %v1184 = vsub.f32 %v716, %v1183
      %v1185 = vand.u32 %v1184, 4294901760
      %1186 = vmatpush1.msra.mxu0 %v1185
      %1187 = vmatprep.subr.mxu0 0.0
      %v1188 = vand.u32 %v715, 4294901760
      %v1189 = vsub.f32 %v715, %v1188
      %v1190 = vand.u32 %v1189, 4294901760
      %1191 = vmatpush1.msra.mxu0 %v1190
      %1192 = vmatprep.subr.mxu0 0.0
      %v1193 = vand.u32 %v714, 4294901760
      %v1194 = vsub.f32 %v714, %v1193
      %v1195 = vand.u32 %v1194, 4294901760
      %1196 = vmatpush1.msra.mxu0 %v1195
      %1197 = vmatprep.subr.mxu0 0.0
      %v1198 = vand.u32 %v713, 4294901760
      %v1199 = vsub.f32 %v713, %v1198
      %v1200 = vand.u32 %v1199, 4294901760
      %1201 = vmatpush1.msra.mxu0 %v1200
      %1202 = vmatprep.subr.mxu0 0.0
      %v1203 = vand.u32 %v712, 4294901760
      %v1204 = vsub.f32 %v712, %v1203
      %v1205 = vand.u32 %v1204, 4294901760
      %1206 = vmatpush1.msra.mxu0 %v1205
      %1207 = vmatprep.subr.mxu0 0.0
      %v1208 = vand.u32 %v711, 4294901760
      %v1209 = vsub.f32 %v711, %v1208
      %v1210 = vand.u32 %v1209, 4294901760
      %1211 = vmatpush1.msra.mxu0 %v1210
      %1212 = vmatprep.subr.mxu0 0.0
      %v1213 = vand.u32 %v710, 4294901760
      %v1214 = vsub.f32 %v710, %v1213
      %v1215 = vand.u32 %v1214, 4294901760
      %1216 = vmatpush1.msra.mxu0 %v1215
      %1217 = vmatprep.subr.mxu0 0.0
      %v1218 = vand.u32 %v709, 4294901760
      %v1219 = vsub.f32 %v709, %v1218
      %v1220 = vand.u32 %v1219, 4294901760
      %1221 = vmatpush1.msra.mxu0 %v1220
      %1222 = vmatprep.subr.mxu0 0.0
      %v1223 = vand.u32 %v708, 4294901760
      %v1224 = vsub.f32 %v708, %v1223
      %v1225 = vand.u32 %v1224, 4294901760
      %1226 = vmatpush1.msra.mxu0 %v1225
      %1227 = vmatprep.subr.mxu0 0.0
      %v1228 = vand.u32 %v707, 4294901760
      %v1229 = vsub.f32 %v707, %v1228
      %v1230 = vand.u32 %v1229, 4294901760
      %1231 = vmatpush1.msra.mxu0 %v1230
      %1232 = vmatprep.subr.mxu0 0.0
      %v1233 = vand.u32 %v706, 4294901760
      %v1234 = vsub.f32 %v706, %v1233
      %v1235 = vand.u32 %v1234, 4294901760
      %1236 = vmatpush1.msra.mxu0 %v1235
      %1237 = vmatprep.subr.mxu0 0.0
      %1238 = vmatpush2.msra.mxu0 0.0
      %1239 = vmatprep.subr.mxu0 0.0
      %1240 = vmatpush2.msra.mxu0 0.0
      %1241 = vmatprep.subr.mxu0 0.0
      %1242 = vmatpush2.msra.mxu0 0.0
      %1243 = vmatprep.subr.mxu0 0.0
      %1244 = vmatpush2.msra.mxu0 0.0
      %1245 = vmatprep.subr.mxu0 0.0
      %1246 = vmatpush2.msra.mxu0 0.0
      %1247 = vmatprep.subr.mxu0 0.0
      %1248 = vmatpush2.msra.mxu0 0.0
      %1249 = vmatprep.subr.mxu0 0.0
      %1250 = vmatpush2.msra.mxu0 0.0
      %1251 = vmatprep.subr.mxu0 0.0
      %1252 = vmatpush2.msra.mxu0 0.0
      %1253 = vmatprep.subr.mxu0 0.0
      %1254 = vmatpush2.msra.mxu0 0.0
      %1255 = vmatprep.subr.mxu0 0.0
      %1256 = vmatpush2.msra.mxu0 0.0
      %1257 = vmatprep.subr.mxu0 0.0
      %1258 = vmatpush2.msra.mxu0 0.0
      %1259 = vmatprep.subr.mxu0 0.0
      %1260 = vmatpush2.msra.mxu0 0.0
      %1261 = vmatprep.subr.mxu0 0.0
      %1262 = vmatpush2.msra.mxu0 0.0
      %1263 = vmatprep.subr.mxu0 0.0
      %1264 = vmatpush2.msra.mxu0 0.0
      %1265 = vmatprep.subr.mxu0 0.0
      %1266 = vmatpush2.msra.mxu0 0.0
      %1267 = vmatprep.subr.mxu0 0.0
      %1268 = vmatpush2.msra.mxu0 0.0
      %1269 = vmatprep.mubr.f32.mxu0 0.0
      %v1270 = vand.u32 %v705, 4294901760
      %1271 = vmatmul.mubr.f32.gmra.mxu0 %v1270
      %v1272 = vpop.f32.mrf.mxu0
      %v1273 = vadd.f32 %v1154, %v1272
      %v1274 = vpop.f32.mrf.mxu0
      %1275 = vdwg.mxu0
      %1276 = vmatprep.subr.mxu0 0.0
      %v1277 = vand.u32 %v721, 4294901760
      %1278 = vmatpush1.msra.mxu0 %v1277
      %1279 = vmatprep.subr.mxu0 0.0
      %v1280 = vand.u32 %v720, 4294901760
      %1281 = vmatpush1.msra.mxu0 %v1280
      %1282 = vmatprep.subr.mxu0 0.0
      %v1283 = vand.u32 %v719, 4294901760
      %1284 = vmatpush1.msra.mxu0 %v1283
      %1285 = vmatprep.subr.mxu0 0.0
      %v1286 = vand.u32 %v718, 4294901760
      %1287 = vmatpush1.msra.mxu0 %v1286
      %1288 = vmatprep.subr.mxu0 0.0
      %v1289 = vand.u32 %v717, 4294901760
      %1290 = vmatpush1.msra.mxu0 %v1289
      %1291 = vmatprep.subr.mxu0 0.0
      %v1292 = vand.u32 %v716, 4294901760
      %1293 = vmatpush1.msra.mxu0 %v1292
      %1294 = vmatprep.subr.mxu0 0.0
      %v1295 = vand.u32 %v715, 4294901760
      %1296 = vmatpush1.msra.mxu0 %v1295
      %1297 = vmatprep.subr.mxu0 0.0
      %v1298 = vand.u32 %v714, 4294901760
      %1299 = vmatpush1.msra.mxu0 %v1298
      %1300 = vmatprep.subr.mxu0 0.0
      %v1301 = vand.u32 %v713, 4294901760
      %1302 = vmatpush1.msra.mxu0 %v1301
      %1303 = vmatprep.subr.mxu0 0.0
      %v1304 = vand.u32 %v712, 4294901760
      %1305 = vmatpush1.msra.mxu0 %v1304
      %1306 = vmatprep.subr.mxu0 0.0
      %v1307 = vand.u32 %v711, 4294901760
      %1308 = vmatpush1.msra.mxu0 %v1307
      %1309 = vmatprep.subr.mxu0 0.0
      %v1310 = vand.u32 %v710, 4294901760
      %1311 = vmatpush1.msra.mxu0 %v1310
      %1312 = vmatprep.subr.mxu0 0.0
      %v1313 = vand.u32 %v709, 4294901760
      %1314 = vmatpush1.msra.mxu0 %v1313
      %1315 = vmatprep.subr.mxu0 0.0
      %v1316 = vand.u32 %v708, 4294901760
      %1317 = vmatpush1.msra.mxu0 %v1316
      %1318 = vmatprep.subr.mxu0 0.0
      %v1319 = vand.u32 %v707, 4294901760
      %1320 = vmatpush1.msra.mxu0 %v1319
      %1321 = vmatprep.subr.mxu0 0.0
      %v1322 = vand.u32 %v706, 4294901760
      %1323 = vmatpush1.msra.mxu0 %v1322
      %1324 = vmatprep.subr.mxu0 0.0
      %1325 = vmatpush2.msra.mxu0 0.0
      %1326 = vmatprep.subr.mxu0 0.0
      %1327 = vmatpush2.msra.mxu0 0.0
      %1328 = vmatprep.subr.mxu0 0.0
      %1329 = vmatpush2.msra.mxu0 0.0
      %1330 = vmatprep.subr.mxu0 0.0
      %1331 = vmatpush2.msra.mxu0 0.0
      %1332 = vmatprep.subr.mxu0 0.0
      %1333 = vmatpush2.msra.mxu0 0.0
      %1334 = vmatprep.subr.mxu0 0.0
      %1335 = vmatpush2.msra.mxu0 0.0
      %1336 = vmatprep.subr.mxu0 0.0
      %1337 = vmatpush2.msra.mxu0 0.0
      %1338 = vmatprep.subr.mxu0 0.0
      %1339 = vmatpush2.msra.mxu0 0.0
      %1340 = vmatprep.subr.mxu0 0.0
      %1341 = vmatpush2.msra.mxu0 0.0
      %1342 = vmatprep.subr.mxu0 0.0
      %1343 = vmatpush2.msra.mxu0 0.0
      %1344 = vmatprep.subr.mxu0 0.0
      %1345 = vmatpush2.msra.mxu0 0.0
      %1346 = vmatprep.subr.mxu0 0.0
      %1347 = vmatpush2.msra.mxu0 0.0
      %1348 = vmatprep.subr.mxu0 0.0
      %1349 = vmatpush2.msra.mxu0 0.0
      %1350 = vmatprep.subr.mxu0 0.0
      %1351 = vmatpush2.msra.mxu0 0.0
      %1352 = vmatprep.subr.mxu0 0.0
      %1353 = vmatpush2.msra.mxu0 0.0
      %1354 = vmatprep.subr.mxu0 0.0
      %1355 = vmatpush2.msra.mxu0 0.0
      %1356 = vmatprep.mubr.f32.mxu0 0.0
      %v1357 = vand.u32 %v705, 4294901760
      %1358 = vmatmul.mubr.f32.gmra.mxu0 %v1357
      %v1359 = vpop.f32.mrf.mxu0
      %v1360 = vadd.f32 %v1273, %v1359
      %v1361 = vpop.f32.mrf.mxu0
      %1362 = vdwg.mxu0
      %v1363 = vlog2.pop %v1360
      %v1364 = vmul.f32 %v1363, 0.6931472
      %v1365 = vadd.f32 %v702, %v1364
      %vm1366 = vcmask 31744
      %1367 = vst.msk [vmem:[%s192] sm:$0xff] %vm1366, %v1365
      %p1368 = scmp.lt.s32.totalorder %s15, 1
      %s1369 = scalar_select %p1368, %s15, 1
      %s1370 = smul.addr %s1369, 8
      %s1371 = scalar_lea.vmem %s4, %s1370
      // Predicated region
      $region37: #{tpu_custom_call.1} parent=35 // pred_check
        %p1372 = pneg %p122
      $region38: #{tpu_custom_call.1} parent=35 // pred_check_branch
        %1374 = sbr.rel (%p1372) target = $region40
      $region39: #{tpu_custom_call.1} parent=35 // pred_region
        _
      $region40: #{tpu_custom_call.1} parent=35 // pred_fallthru
        _
    $region36: #{tpu_custom_call.1} parent=5 // pred_fallthru
      _
    %p1375 = scmp.le.s32.totalorder 2, %s10
    // Predicated region
    $region41: #{tpu_custom_call.1} parent=5 // pred_check
      %p1376 = pneg %p1375
    $region42: #{tpu_custom_call.1} parent=5 // pred_check_branch
      %1378 = sbr.rel (%p1376) target = $region44
    $region43: #{tpu_custom_call.1} parent=5 // pred_region
      %s1379 = ssub.s32 %s10, 2
      // Predicated region
      $region45: #{tpu_custom_call.1} parent=43 // pred_check
        %p1380 = pneg %p128
      $region46: #{tpu_custom_call.1} parent=43 // pred_check_branch
        %1382 = sbr.rel (%p1380) target = $region48
      $region47: #{tpu_custom_call.1} parent=43 // pred_region
        %p1383 = scmp.lt.s32.totalorder %s16, 1
        %s1384 = scalar_select %p1383, %s16, 1
        %s1385 = smul.addr %s1384, 8
        %s1386 = scalar_lea.vmem %s4, %s1385
      $region48: #{tpu_custom_call.1} parent=43 // pred_fallthru
        _
    $region44: #{tpu_custom_call.1} parent=5 // pred_fallthru
      _
  $region6: #{tpu_custom_call.1} parent=0 // loop_footer
    %s14 = sadd.s32 1, %s10
  $region7: #{tpu_custom_call.1} parent=0 // loop_footer_branch
    %9 = sbr.rel target = $region3
  $region8: #{tpu_custom_call.1} parent=0 // loop_exit
    _

</llo_original>
